<compile_context>
chip_gen: v7x
topology: tpu7x:2x2x1
jax: 0.10.0
libtpu: 0.0.40
codegen_flags: <defaults>
</compile_context>

<pallas_src>
import functools

import jax
import jax.numpy as jnp
from jax import lax
from jax.experimental import pallas as pl
from jax.experimental.pallas import tpu as pltpu


def _round_up(x, m):
    return (x + m - 1) // m * m


def _pick_tile(extent, lo, hi, step):
    """Largest tile in [lo, hi] (multiples of `step`) minimizing padded total."""
    best_t, best_pad = lo, _round_up(extent, lo)
    for t in range(lo, hi + step, step):
        pad = _round_up(extent, t)
        if pad < best_pad or (pad == best_pad and t > best_t):
            best_t, best_pad = t, pad
    return best_t, best_pad


# ----------------------------- Pallas kernels ------------------------------

def _conv_stats_kernel(w_ref, p_ref, y_ref, sum_ref, sq_ref, acc_ref):
    """Grid (b, o, i, k): one (TOC, TM) conv tile, K-accumulated in f32 VMEM.

    w_ref:   (TOC, TK)  bf16 weight K-slice
    p_ref:   (TK, TM)   bf16 im2col patch tile
    y_ref:   (TOC, TM)  bf16 conv tile (OC-major -> already NCHW ordered)
    sum_ref: (TOC, 1)   f32 per-tile BN partial sum over TM
    sq_ref:  (TOC, 1)   f32 per-tile BN partial sum of squares over TM
    acc_ref: (TOC, TM)  f32 accumulator scratch (resident across the K axis)
    """
    @pl.when(pl.program_id(3) == 0)
    def _():
        acc_ref[...] = jnp.zeros_like(acc_ref)

    acc_ref[...] += jnp.dot(w_ref[...], p_ref[...],
                            preferred_element_type=jnp.float32)

    @pl.when(pl.program_id(3) == pl.num_programs(3) - 1)
    def _():
        y = acc_ref[...]
        y_ref[...] = y.astype(y_ref.dtype)
        # Padded patch columns / padded K rows / padded OC rows are all zero,
        # so these raw f32 partials stay exact when divided by the true element
        # count on the host.  They are tiny column stores (negligible traffic),
        # emitted from the f32 accumulator before the bf16 slab rounding.
        sum_ref[...] = jnp.sum(y, axis=1, keepdims=True)
        sq_ref[...] = jnp.sum(y * y, axis=1, keepdims=True)


def _bn_relu_kernel(y_ref, scale_ref, shift_ref, o_ref):
    """Fused BatchNorm(affine) + ReLU on one (TOC, TM) tile, in-place (aliased)."""
    y = y_ref[...].astype(jnp.float32)
    o_ref[...] = jnp.maximum(y * scale_ref[...] + shift_ref[...],
                             0.0).astype(o_ref.dtype)


# ------------------------------ host wrapper --------------------------------

def _im2col_t(x, kh, kw, stride, padding, dilation):
    """x: (N, C, H, W) -> transposed patches (N, C*KH*KW, OH*OW), plus (OH, OW).

    K ordering is c-major then (kh, kw), matching weight.reshape(OC, -1).
    dtype-preserving: pass bf16 in to build the expanded intermediate in bf16.
    """
    n, c, h, w = x.shape
    eff_kh = (kh - 1) * dilation + 1
    eff_kw = (kw - 1) * dilation + 1
    oh = (h + 2 * padding - eff_kh) // stride + 1
    ow = (w + 2 * padding - eff_kw) // stride + 1
    xp = jnp.pad(x, ((0, 0), (0, 0), (padding, padding), (padding, padding)))
    cols = []
    for i in range(kh):
        for j in range(kw):
            hi, wj = i * dilation, j * dilation
            sl = xp[:, :, hi:hi + (oh - 1) * stride + 1:stride,
                          wj:wj + (ow - 1) * stride + 1:stride]   # (N,C,OH,OW)
            cols.append(sl.reshape(n, c, oh * ow))
    p = jnp.stack(cols, axis=0)                 # (KH*KW, N, C, OH*OW)
    p = jnp.transpose(p, (1, 2, 0, 3))          # (N, C, KH*KW, OH*OW)
    return p.reshape(n, c * kh * kw, oh * ow), (oh, ow)


@functools.partial(jax.jit, static_argnames=("stride", "padding", "dilation"))
def basic_conv_forward(x, weight, gamma, beta, *, stride=1, padding=0,
                       dilation=1):
    """BasicConv forward: conv(bias=False) -> BN(train batch stats) -> ReLU.

    x: (N, Cin, H, W) f32, weight: (OC, Cin, KH, KW) f32, gamma/beta: (OC,) f32
    Returns (N, OC, OH, OW) f32.
    """
    n, cin, _, _ = x.shape
    oc, _, kh, kw = weight.shape
    k = cin * kh * kw

    # bf16 BEFORE im2col so the KH*KW-expanded intermediate is half-width.
    patches, (oh, ow) = _im2col_t(x.astype(jnp.bfloat16), kh, kw, stride,
                                  padding, dilation)
    m_pb = oh * ow                        # output positions per batch element
    m_total = n * m_pb                    # true BN element count per channel

    # Lane tile: 128-multiple up to 1024, minimizing padding waste.
    tm, m_pad = _pick_tile(m_pb, 128, 1024, 128)
    nt = m_pad // tm

    # OC tiling: single 16-aligned tile up to 256 channels, else 128..256 tiles
    # (keeps the resident weight block bounded and fills the MXU better).
    if oc <= 256:
        toc = _round_up(oc, 16)
        ocp = toc
    else:
        toc, ocp = _pick_tile(oc, 128, 256, 16)
    noc = ocp // toc

    # K tiling ("arbitrary" innermost axis): full-extent block when small, else
    # 128-aligned chunks -> bounds per-step VMEM (v7x 64 MiB, v5e 16 MiB scoped).
    if k <= 1024:
        tk, k_pad = k, k
    else:
        tk, k_pad = _pick_tile(k, 128, 1024, 128)
    kt = k_pad // tk

    patches_p = jnp.pad(patches, ((0, 0), (0, k_pad - k), (0, m_pad - m_pb)))
    w2d = jnp.pad(weight.astype(jnp.bfloat16).reshape(oc, k),
                  ((0, ocp - oc), (0, k_pad - k)))

    vmem_limit = 32 * 1024 * 1024   # >= scoped defaults on all gens, < v7x physical

    # 3-deep pipeline on the streamed patch input when there are enough grid
    # steps to benefit; fall back if this JAX version lacks pipeline_mode.
    patch_block = (None, tk, tm)
    patch_imap = lambda b, o, i, kk: (b, kk, i)
    patch_spec = pl.BlockSpec(patch_block, patch_imap)
    if n * nt * kt >= 4 and hasattr(pl, "Buffered"):
        try:
            patch_spec = pl.BlockSpec(patch_block, patch_imap,
                                      pipeline_mode=pl.Buffered(3))
        except TypeError:
            pass

    conv, psum, psq = pl.pallas_call(
        _conv_stats_kernel,
        out_shape=(
            jax.ShapeDtypeStruct((n, ocp, m_pad), jnp.bfloat16),   # bf16 slab
            jax.ShapeDtypeStruct((n, nt, ocp, 1), jnp.float32),
            jax.ShapeDtypeStruct((n, nt, ocp, 1), jnp.float32),
        ),
        grid=(n, noc, nt, kt),
        in_specs=[
            pl.BlockSpec((toc, tk), lambda b, o, i, kk: (o, kk)),
            patch_spec,
        ],
        out_specs=(
            pl.BlockSpec((None, toc, tm), lambda b, o, i, kk: (b, o, i)),
            pl.BlockSpec((None, None, toc, 1), lambda b, o, i, kk: (b, i, o, 0)),
            pl.BlockSpec((None, None, toc, 1), lambda b, o, i, kk: (b, i, o, 0)),
        ),
        scratch_shapes=[pltpu.VMEM((toc, tm), jnp.float32)],
        compiler_params=pltpu.CompilerParams(
            dimension_semantics=("parallel", "parallel", "parallel", "arbitrary"),
            vmem_limit_bytes=vmem_limit),
    )(w2d, patches_p)

    # Finalize training-mode BatchNorm statistics (biased variance) from the
    # tiny f32 partials -- no extra pass over the conv slab.
    # TODO(synk): E[y^2]-E[y]^2 in f32 can cancel when |mean| >> std; switch to
    #             per-tile centered partials + Chan combine if that regime matters.
    s = jnp.sum(psum, axis=(0, 1))                       # (OCp, 1)
    sq = jnp.sum(psq, axis=(0, 1))                       # (OCp, 1)
    mean = s / m_total
    var = jnp.maximum(sq / m_total - mean * mean, 0.0)
    inv = lax.rsqrt(var + 1e-5)
    gamma_p = jnp.pad(gamma.astype(jnp.float32), (0, ocp - oc)).reshape(ocp, 1)
    beta_p = jnp.pad(beta.astype(jnp.float32), (0, ocp - oc)).reshape(ocp, 1)
    scale = gamma_p * inv
    shift = beta_p - mean * scale

    bn = pl.pallas_call(
        _bn_relu_kernel,
        out_shape=jax.ShapeDtypeStruct((n, ocp, m_pad), jnp.bfloat16),
        grid=(n, noc, nt),
        in_specs=[
            pl.BlockSpec((None, toc, tm), lambda b, o, i: (b, o, i)),
            pl.BlockSpec((toc, 1), lambda b, o, i: (o, 0)),
            pl.BlockSpec((toc, 1), lambda b, o, i: (o, 0)),
        ],
        out_specs=pl.BlockSpec((None, toc, tm), lambda b, o, i: (b, o, i)),
        input_output_aliases={0: 0},     # BN+ReLU in place on the conv slab
        compiler_params=pltpu.CompilerParams(
            dimension_semantics=("parallel", "parallel", "parallel"),
            vmem_limit_bytes=vmem_limit),
    )(conv, scale, shift)

    # OC-major layout -> direct NCHW reshape (no full-array transpose); crop
    # the channel/lane padding and upcast to f32 at the very end.
    return bn[:, :oc, :m_pb].astype(jnp.float32).reshape(n, oc, oh, ow)


# ------------------------------- reference ----------------------------------

def _reference(x, weight, gamma, beta, stride, padding, dilation,
               conv_dtype=jnp.float32):
    y = lax.conv_general_dilated(
        x.astype(conv_dtype), weight.astype(conv_dtype),
        window_strides=(stride, stride),
        padding=[(padding, padding), (padding, padding)],
        rhs_dilation=(dilation, dilation),
        dimension_numbers=("NCHW", "OIHW", "NCHW"),
        preferred_element_type=jnp.float32)
    mean = jnp.mean(y, axis=(0, 2, 3), keepdims=True)
    var = jnp.mean((y - mean) ** 2, axis=(0, 2, 3), keepdims=True)
    y = (y - mean) * lax.rsqrt(var + 1e-5)
    y = y * gamma.reshape(1, -1, 1, 1) + beta.reshape(1, -1, 1, 1)
    return jnp.maximum(y, 0.0)


if __name__ == "__main__":
    key = jax.random.PRNGKey(0)
    k_x, k_w, k_g, k_b = jax.random.split(key, 4)

    # BasicConv(in_planes=4, out_planes=8, kernel_size=3, stride=1, padding=1)
    N, CIN, H, W = 2, 4, 16, 16
    OC, KH, KW = 8, 3, 3
    STRIDE, PAD, DIL = 1, 1, 1

    x = jax.random.normal(k_x, (N, CIN, H, W), dtype=jnp.float32)
    weight = jax.random.normal(k_w, (OC, CIN, KH, KW), dtype=jnp.float32) * 0.1
    gamma = 1.0 + 0.1 * jax.random.normal(k_g, (OC,), dtype=jnp.float32)
    beta = 0.1 * jax.random.normal(k_b, (OC,), dtype=jnp.float32)

    out = basic_conv_forward(x, weight, gamma, beta,
                             stride=STRIDE, padding=PAD, dilation=DIL)
    out = jax.block_until_ready(out)
    assert out.shape == (N, OC, H, W), out.shape

    # Reference whose conv also uses bf16 inputs (isolates the kernel from the
    # MXU-input quantization).  Remaining differences are the bf16 storage of
    # the conv slab (amplified by the BN scale ~ gamma/std) and of the BN
    # output -- both introduced per the bandwidth-oriented review -- hence the
    # looser max tolerance; the mean check guards against gross errors.
    ref_bf16 = _reference(x, weight, gamma, beta, STRIDE, PAD, DIL,
                          conv_dtype=jnp.bfloat16)
    max_err = float(jnp.max(jnp.abs(out - ref_bf16)))
    mean_err = float(jnp.mean(jnp.abs(out - ref_bf16)))
    assert max_err < 1e-1, max_err
    assert mean_err < 1e-2, mean_err

    # Sanity check vs the full-f32 reference (adds bf16 MXU-input quantization,
    # standard practice on v5e/v6e/v7x).
    ref_f32 = _reference(x, weight, gamma, beta, STRIDE, PAD, DIL)
    err_f32 = float(jnp.max(jnp.abs(out - ref_f32)))
    assert err_f32 < 2e-1, err_f32

    print("KERNEL_OK")
</pallas_src>

<mosaic_0001>
module attributes {stable_mosaic.version = 11 : i64} {
  func.func @_conv_stats_kernel(%arg0: i32, %arg1: i32, %arg2: i32, %arg3: i32, %arg4: memref<16x36xbf16, #tpu.memory_space<vmem>>, %arg5: memref<1x36x256xbf16, #tpu.memory_space<vmem>>, %arg6: memref<1x16x256xbf16, #tpu.memory_space<vmem>>, %arg7: memref<1x1x16x1xf32, #tpu.memory_space<vmem>>, %arg8: memref<1x1x16x1xf32, #tpu.memory_space<vmem>>, %arg9: memref<16x256xf32, #tpu.memory_space<vmem>>) attributes {dimension_semantics = [#tpu.dimension_semantics<parallel>, #tpu.dimension_semantics<parallel>, #tpu.dimension_semantics<parallel>, #tpu.dimension_semantics<arbitrary>], iteration_bounds = array<i64: 2, 1, 1, 1>, scalar_prefetch = 0 : i64, scratch_operands = 1 : i64, tpu.core_type = #tpu.core_type<tc>, window_params = [{transform_indices = @transform_0, window_bounds = array<i64: 16, 36>}, {transform_indices = @transform_1, window_bounds = array<i64: 1, 36, 256>}, {transform_indices = @transform_2, window_bounds = array<i64: 1, 16, 256>}, {transform_indices = @transform_3, window_bounds = array<i64: 1, 1, 16, 1>}, {transform_indices = @transform_4, window_bounds = array<i64: 1, 1, 16, 1>}]} {
    %c0_i32 = arith.constant 0 : i32
    %0 = arith.cmpi eq, %arg3, %c0_i32 : i32
    %1 = arith.extui %0 : i1 to i32
    %c0_i32_0 = arith.constant 0 : i32
    %2 = arith.cmpi ne, %1, %c0_i32_0 : i32
    scf.if %2 {
      %cst_11 = arith.constant 0.000000e+00 : f32
      %13 = vector.broadcast %cst_11 : f32 to vector<16x256xf32>
      %c0_12 = arith.constant 0 : index
      %c0_13 = arith.constant 0 : index
      %14 = vector.load %arg9[%c0_12, %c0_13] : memref<16x256xf32, #tpu.memory_space<vmem>>, vector<16x256xf32>
      tpu.vector_store %arg9[%c0_12, %c0_13], %13 {strides = array<i32>} : memref<16x256xf32, #tpu.memory_space<vmem>>, vector<16x256xf32>,
    } else {
    }
    %c0 = arith.constant 0 : index
    %c0_1 = arith.constant 0 : index
    %3 = vector.load %arg9[%c0, %c0_1] : memref<16x256xf32, #tpu.memory_space<vmem>>, vector<16x256xf32>
    %c0_2 = arith.constant 0 : index
    %c0_3 = arith.constant 0 : index
    %4 = vector.load %arg4[%c0_2, %c0_3] : memref<16x36xbf16, #tpu.memory_space<vmem>>, vector<16x36xbf16>
    %c0_4 = arith.constant 0 : index
    %c0_5 = arith.constant 0 : index
    %c0_6 = arith.constant 0 : index
    %5 = vector.load %arg5[%c0_4, %c0_5, %c0_6] : memref<1x36x256xbf16, #tpu.memory_space<vmem>>, vector<1x36x256xbf16>
    %6 = vector.shape_cast %5 : vector<1x36x256xbf16> to vector<36x256xbf16>
    %cst = arith.constant dense<0.000000e+00> : vector<16x256xf32>
    %7 = tpu.matmul %4, %6, %cst {dimension_numbers = #tpu.dot_dimension_numbers<[1], [0], [0], [1], [0, 0, 1, 1], [], []>} : vector<16x36xbf16>, vector<36x256xbf16>, vector<16x256xf32> -> vector<16x256xf32>
    %8 = arith.addf %3, %7 : vector<16x256xf32>
    %c0_7 = arith.constant 0 : index
    %c0_8 = arith.constant 0 : index
    %9 = vector.load %arg9[%c0_7, %c0_8] : memref<16x256xf32, #tpu.memory_space<vmem>>, vector<16x256xf32>
    tpu.vector_store %arg9[%c0_7, %c0_8], %8 {strides = array<i32>} : memref<16x256xf32, #tpu.memory_space<vmem>>, vector<16x256xf32>,
    %c0_i32_9 = arith.constant 0 : i32
    %10 = arith.cmpi eq, %arg3, %c0_i32_9 : i32
    %11 = arith.extui %10 : i1 to i32
    %c0_i32_10 = arith.constant 0 : i32
    %12 = arith.cmpi ne, %11, %c0_i32_10 : i32
    scf.if %12 {
      %c0_11 = arith.constant 0 : index
      %c0_12 = arith.constant 0 : index
      %13 = vector.load %arg9[%c0_11, %c0_12] : memref<16x256xf32, #tpu.memory_space<vmem>>, vector<16x256xf32>
      %14 = arith.truncf %13 : vector<16x256xf32> to vector<16x256xbf16>
      %c0_13 = arith.constant 0 : index
      %c0_14 = arith.constant 0 : index
      %c0_15 = arith.constant 0 : index
      %15 = vector.load %arg6[%c0_13, %c0_14, %c0_15] : memref<1x16x256xbf16, #tpu.memory_space<vmem>>, vector<1x16x256xbf16>
      %16 = vector.shape_cast %15 : vector<1x16x256xbf16> to vector<16x256xbf16>
      %17 = vector.shape_cast %14 : vector<16x256xbf16> to vector<1x16x256xbf16>
      tpu.vector_store %arg6[%c0_13, %c0_14, %c0_15], %17 {strides = array<i32>} : memref<1x16x256xbf16, #tpu.memory_space<vmem>>, vector<1x16x256xbf16>,
      %cst_16 = arith.constant dense<0.000000e+00> : vector<16xf32>
      %18 = vector.multi_reduction <add>, %13, %cst_16 [1] : vector<16x256xf32> to vector<16xf32>
      %19 = vector.shape_cast %18 : vector<16xf32> to vector<16x1xf32>
      %c0_17 = arith.constant 0 : index
      %c0_18 = arith.constant 0 : index
      %c0_19 = arith.constant 0 : index
      %c0_20 = arith.constant 0 : index
      %20 = vector.load %arg7[%c0_17, %c0_18, %c0_19, %c0_20] : memref<1x1x16x1xf32, #tpu.memory_space<vmem>>, vector<1x1x16x1xf32>
      %21 = vector.shape_cast %20 : vector<1x1x16x1xf32> to vector<16x1xf32>
      %22 = vector.shape_cast %19 : vector<16x1xf32> to vector<1x1x16x1xf32>
      tpu.vector_store %arg7[%c0_17, %c0_18, %c0_19, %c0_20], %22 {strides = array<i32>} : memref<1x1x16x1xf32, #tpu.memory_space<vmem>>, vector<1x1x16x1xf32>,
      %23 = arith.mulf %13, %13 : vector<16x256xf32>
      %cst_21 = arith.constant dense<0.000000e+00> : vector<16xf32>
      %24 = vector.multi_reduction <add>, %23, %cst_21 [1] : vector<16x256xf32> to vector<16xf32>
      %25 = vector.shape_cast %24 : vector<16xf32> to vector<16x1xf32>
      %c0_22 = arith.constant 0 : index
      %c0_23 = arith.constant 0 : index
      %c0_24 = arith.constant 0 : index
      %c0_25 = arith.constant 0 : index
      %26 = vector.load %arg8[%c0_22, %c0_23, %c0_24, %c0_25] : memref<1x1x16x1xf32, #tpu.memory_space<vmem>>, vector<1x1x16x1xf32>
      %27 = vector.shape_cast %26 : vector<1x1x16x1xf32> to vector<16x1xf32>
      %28 = vector.shape_cast %25 : vector<16x1xf32> to vector<1x1x16x1xf32>
      tpu.vector_store %arg8[%c0_22, %c0_23, %c0_24, %c0_25], %28 {strides = array<i32>} : memref<1x1x16x1xf32, #tpu.memory_space<vmem>>, vector<1x1x16x1xf32>,
    } else {
    }
    return
  }
  func.func @transform_0(%arg0: i32, %arg1: i32, %arg2: i32, %arg3: i32) -> (i32, i32) {
    %c0_i32 = arith.constant 0 : i32
    return %arg1, %arg3 : i32, i32
  }
  func.func @transform_1(%arg0: i32, %arg1: i32, %arg2: i32, %arg3: i32) -> (i32, i32, i32) {
    %c0_i32 = arith.constant 0 : i32
    return %arg0, %arg3, %arg2 : i32, i32, i32
  }
  func.func @transform_2(%arg0: i32, %arg1: i32, %arg2: i32, %arg3: i32) -> (i32, i32, i32) {
    %c0_i32 = arith.constant 0 : i32
    return %arg0, %arg1, %arg2 : i32, i32, i32
  }
  func.func @transform_3(%arg0: i32, %arg1: i32, %arg2: i32, %arg3: i32) -> (i32, i32, i32, i32) {
    %c0_i32 = arith.constant 0 : i32
    %c0_i32_0 = arith.constant 0 : i32
    return %arg0, %arg2, %arg1, %c0_i32 : i32, i32, i32, i32
  }
  func.func @transform_4(%arg0: i32, %arg1: i32, %arg2: i32, %arg3: i32) -> (i32, i32, i32, i32) {
    %c0_i32 = arith.constant 0 : i32
    %c0_i32_0 = arith.constant 0 : i32
    return %arg0, %arg2, %arg1, %c0_i32 : i32, i32, i32, i32
  }
}

module attributes {stable_mosaic.version = 11 : i64} {
  func.func @_bn_relu_kernel(%arg0: i32, %arg1: i32, %arg2: i32, %arg3: memref<1x16x256xbf16, #tpu.memory_space<vmem>>, %arg4: memref<16x1xf32, #tpu.memory_space<vmem>>, %arg5: memref<16x1xf32, #tpu.memory_space<vmem>>, %arg6: memref<1x16x256xbf16, #tpu.memory_space<vmem>>) attributes {dimension_semantics = [#tpu.dimension_semantics<parallel>, #tpu.dimension_semantics<parallel>, #tpu.dimension_semantics<parallel>], iteration_bounds = array<i64: 2, 1, 1>, scalar_prefetch = 0 : i64, scratch_operands = 0 : i64, tpu.core_type = #tpu.core_type<tc>, window_params = [{transform_indices = @transform_0, window_bounds = array<i64: 1, 16, 256>}, {transform_indices = @transform_1, window_bounds = array<i64: 16, 1>}, {transform_indices = @transform_2, window_bounds = array<i64: 16, 1>}, {transform_indices = @transform_3, window_bounds = array<i64: 1, 16, 256>}]} {
    %c0 = arith.constant 0 : index
    %c0_0 = arith.constant 0 : index
    %c0_1 = arith.constant 0 : index
    %0 = vector.load %arg3[%c0, %c0_0, %c0_1] : memref<1x16x256xbf16, #tpu.memory_space<vmem>>, vector<1x16x256xbf16>
    %1 = vector.shape_cast %0 : vector<1x16x256xbf16> to vector<16x256xbf16>
    %2 = arith.extf %1 : vector<16x256xbf16> to vector<16x256xf32>
    %c0_2 = arith.constant 0 : index
    %c0_3 = arith.constant 0 : index
    %3 = vector.load %arg4[%c0_2, %c0_3] : memref<16x1xf32, #tpu.memory_space<vmem>>, vector<16x1xf32>
    %4 = vector.broadcast %3 : vector<16x1xf32> to vector<16x256xf32>
    %5 = arith.mulf %2, %4 : vector<16x256xf32>
    %c0_4 = arith.constant 0 : index
    %c0_5 = arith.constant 0 : index
    %6 = vector.load %arg5[%c0_4, %c0_5] : memref<16x1xf32, #tpu.memory_space<vmem>>, vector<16x1xf32>
    %7 = vector.broadcast %6 : vector<16x1xf32> to vector<16x256xf32>
    %8 = arith.addf %5, %7 : vector<16x256xf32>
    %cst = arith.constant 0.000000e+00 : f32
    %9 = vector.broadcast %cst : f32 to vector<16x256xf32>
    %10 = arith.maximumf %8, %9 : vector<16x256xf32>
    %11 = arith.truncf %10 : vector<16x256xf32> to vector<16x256xbf16>
    %c0_6 = arith.constant 0 : index
    %c0_7 = arith.constant 0 : index
    %c0_8 = arith.constant 0 : index
    %12 = vector.load %arg6[%c0_6, %c0_7, %c0_8] : memref<1x16x256xbf16, #tpu.memory_space<vmem>>, vector<1x16x256xbf16>
    %13 = vector.shape_cast %12 : vector<1x16x256xbf16> to vector<16x256xbf16>
    %14 = vector.shape_cast %11 : vector<16x256xbf16> to vector<1x16x256xbf16>
    tpu.vector_store %arg6[%c0_6, %c0_7, %c0_8], %14 {strides = array<i32>} : memref<1x16x256xbf16, #tpu.memory_space<vmem>>, vector<1x16x256xbf16>,
    return
  }
  func.func @transform_0(%arg0: i32, %arg1: i32, %arg2: i32) -> (i32, i32, i32) {
    %c0_i32 = arith.constant 0 : i32
    return %arg0, %arg1, %arg2 : i32, i32, i32
  }
  func.func @transform_1(%arg0: i32, %arg1: i32, %arg2: i32) -> (i32, i32) {
    %c0_i32 = arith.constant 0 : i32
    %c0_i32_0 = arith.constant 0 : i32
    return %arg1, %c0_i32 : i32, i32
  }
  func.func @transform_2(%arg0: i32, %arg1: i32, %arg2: i32) -> (i32, i32) {
    %c0_i32 = arith.constant 0 : i32
    %c0_i32_0 = arith.constant 0 : i32
    return %arg1, %c0_i32 : i32, i32
  }
  func.func @transform_3(%arg0: i32, %arg1: i32, %arg2: i32) -> (i32, i32, i32) {
    %c0_i32 = arith.constant 0 : i32
    return %arg0, %arg1, %arg2 : i32, i32, i32
  }
}

</mosaic_0001>

<llo_original>
// kernel: basic_conv_forward.3
$region0: #{basic_conv_forward.3}
  #allocation0 [shape = 'u32[]', space=smem, size = 0x4, offset = 0x4, fixed_abs, tag = 'smem constant byte address 0x4 - core index']
  #allocation1 [shape = 'u32[144,128]{1,0:T(1,128)}', space=vmem, size = 0x12000, scoped, tag = 'internal scratch']
  %s0 = inlined_call_operand.vmem [shape: bf16[2,16,256], index: 0, kind: input, shape index: {}, may-alias: {0,3}]
  %s1 = inlined_call_operand.vmem [shape: f32[16,1], index: 1, kind: input, shape index: {}]
  %s2 = inlined_call_operand.vmem [shape: f32[16,1], index: 2, kind: input, shape index: {}]
  %s3 = inlined_call_operand.vmem [shape: bf16[2,16,256], index: 3, kind: output, shape index: {}, may-alias: {0,3}]
  %s4 = sld [smem:[#allocation0]]
  $region45: #{basic_conv_forward.3} parent=0
    _
  %s6 = ssub.s32 1, %s4
  %s7 = scalar_select 0, %s6, %s4
  loop: start=0, step=1, limit=4
  $region2: #{basic_conv_forward.3} parent=0 // loop_pre_header
    _
  $region3: #{basic_conv_forward.3} parent=0 // loop_header
    %s9 = sphi 0, %s13
    %p10 = scmp.ge.s32.totalorder %s9, 4
    %s16 = sphi 0, %s35
    %s17 = sphi 0, %s31
    %s18 = sphi 0, %s27
    %s19 = sphi 0, %s16
    %s20 = sphi 0, %s17
    %s21 = sphi 0, %s18
    %s22 = sphi 0, %s19
    %s23 = sphi 0, %s20
    %s24 = sphi 0, %s21
    %s42 = sphi 0, %s44
    %s45 = sphi 0, %s42
    %s46 = sphi 0, %s45
    %s62 = sphi 0, %s46
    %s68 = sphi 0, %s70
    %s71 = sphi 0, %s68
    %s72 = sphi 0, %s71
    %s88 = sphi 0, %s72
    %s94 = sphi 0, %s96
    %s97 = sphi 0, %s94
    %s98 = sphi 0, %s97
    %s114 = sphi 0, %s98
    %s124 = sphi 0, %s126
    %s127 = sphi 0, %s124
    %s128 = sphi 0, %s127
    %s144 = sphi 0, %s128
  $region4: #{basic_conv_forward.3} parent=0 // loop_header_branch
    %12 = sbr.rel (%p10) target = $region8
  $region5: #{basic_conv_forward.3} parent=0 // loop_body
    %s14 = ssub.s32 %s9, 1
    %s15 = ssub.s32 %s9, 2
    %s25 = sadd.s32 1, %s18
    %p26 = scmp.ge.s32.totalorder %s25, 1
    %s27 = scalar_select %p26, 0, %s25
    %s28 = sadd.s32 1, %s17
    %s29 = scalar_select %p26, %s28, %s17
    %p30 = scmp.ge.s32.totalorder %s29, 1
    %s31 = scalar_select %p30, 0, %s29
    %s32 = sadd.s32 1, %s16
    %s33 = scalar_select %p30, %s32, %s16
    %p34 = scmp.ge.s32.totalorder %s33, 2
    %s35 = scalar_select %p34, 0, %s33
    %s36 = ssub.s32 %s16, %s35
    %s37 = ssub.s32 %s17, %s31
    %s38 = sor.u32 %s36, %s37
    %s39 = ssub.s32 %s18, %s27
    %s40 = sor.u32 %s38, %s39
    %p41 = scmp.eq.s32.totalorder %s40, 0
    %s43 = sadd.s32 %s42, 1
    %s44 = scalar_select %p41, %s42, %s43
    %p47 = pneg %p41
    %p48 = scmp.eq.s32.totalorder %s9, 1
    %p49 = por %p47, %p48
    %p50 = scmp.ne.s32.totalorder %s42, %s45
    %p51 = scmp.eq.s32.totalorder %s9, 0
    %p52 = por %p50, %p51
    %p53 = scmp.ne.s32.totalorder %s42, %s45
    %p54 = scmp.eq.s32.totalorder %s14, 1
    %p55 = por %p53, %p54
    %p56 = scmp.ne.s32.totalorder %s45, %s46
    %p57 = scmp.eq.s32.totalorder %s14, 0
    %p58 = por %p56, %p57
    %p59 = scmp.ne.s32.totalorder %s45, %s46
    %p60 = scmp.eq.s32.totalorder %s15, 1
    %p61 = por %p59, %p60
    %p63 = scmp.ne.s32.totalorder %s46, %s62
    %p64 = scmp.eq.s32.totalorder %s15, 0
    %p65 = por %p63, %p64
    %s66 = ssub.s32 %s17, %s31
    %p67 = scmp.eq.s32.totalorder %s66, 0
    %s69 = sadd.s32 %s68, 1
    %s70 = scalar_select %p67, %s68, %s69
    %p73 = pneg %p67
    %p74 = scmp.eq.s32.totalorder %s9, 1
    %p75 = por %p73, %p74
    %p76 = scmp.ne.s32.totalorder %s68, %s71
    %p77 = scmp.eq.s32.totalorder %s9, 0
    %p78 = por %p76, %p77
    %p79 = scmp.ne.s32.totalorder %s68, %s71
    %p80 = scmp.eq.s32.totalorder %s14, 1
    %p81 = por %p79, %p80
    %p82 = scmp.ne.s32.totalorder %s71, %s72
    %p83 = scmp.eq.s32.totalorder %s14, 0
    %p84 = por %p82, %p83
    %p85 = scmp.ne.s32.totalorder %s71, %s72
    %p86 = scmp.eq.s32.totalorder %s15, 1
    %p87 = por %p85, %p86
    %p89 = scmp.ne.s32.totalorder %s72, %s88
    %p90 = scmp.eq.s32.totalorder %s15, 0
    %p91 = por %p89, %p90
    %s92 = ssub.s32 %s17, %s31
    %p93 = scmp.eq.s32.totalorder %s92, 0
    %s95 = sadd.s32 %s94, 1
    %s96 = scalar_select %p93, %s94, %s95
    %p99 = pneg %p93
    %p100 = scmp.eq.s32.totalorder %s9, 1
    %p101 = por %p99, %p100
    %p102 = scmp.ne.s32.totalorder %s94, %s97
    %p103 = scmp.eq.s32.totalorder %s9, 0
    %p104 = por %p102, %p103
    %p105 = scmp.ne.s32.totalorder %s94, %s97
    %p106 = scmp.eq.s32.totalorder %s14, 1
    %p107 = por %p105, %p106
    %p108 = scmp.ne.s32.totalorder %s97, %s98
    %p109 = scmp.eq.s32.totalorder %s14, 0
    %p110 = por %p108, %p109
    %p111 = scmp.ne.s32.totalorder %s97, %s98
    %p112 = scmp.eq.s32.totalorder %s15, 1
    %p113 = por %p111, %p112
    %p115 = scmp.ne.s32.totalorder %s98, %s114
    %p116 = scmp.eq.s32.totalorder %s15, 0
    %p117 = por %p115, %p116
    %s118 = ssub.s32 %s16, %s35
    %s119 = ssub.s32 %s17, %s31
    %s120 = sor.u32 %s118, %s119
    %s121 = ssub.s32 %s18, %s27
    %s122 = sor.u32 %s120, %s121
    %p123 = scmp.eq.s32.totalorder %s122, 0
    %s125 = sadd.s32 %s124, 1
    %s126 = scalar_select %p123, %s124, %s125
    %p129 = pneg %p123
    %p130 = scmp.eq.s32.totalorder %s9, 1
    %p131 = por %p129, %p130
    %p132 = scmp.ne.s32.totalorder %s124, %s127
    %p133 = scmp.eq.s32.totalorder %s9, 0
    %p134 = por %p132, %p133
    %p135 = scmp.ne.s32.totalorder %s124, %s127
    %p136 = scmp.eq.s32.totalorder %s14, 1
    %p137 = por %p135, %p136
    %p138 = scmp.ne.s32.totalorder %s127, %s128
    %p139 = scmp.eq.s32.totalorder %s14, 0
    %p140 = por %p138, %p139
    %p141 = scmp.ne.s32.totalorder %s127, %s128
    %p142 = scmp.eq.s32.totalorder %s15, 1
    %p143 = por %p141, %p142
    %p145 = scmp.ne.s32.totalorder %s128, %s144
    %p146 = scmp.eq.s32.totalorder %s15, 0
    %p147 = por %p145, %p146
    %p148 = scmp.le.s32.totalorder 1, %s9
    %p149 = scmp.lt.s32.totalorder %s9, 3
    %p150 = pnand %p148, %p149
    %p151 = pneg %p150
    // Predicated region
    $region9: #{basic_conv_forward.3} parent=5 // pred_check
      _
    $region10: #{basic_conv_forward.3} parent=5 // pred_check_branch
      %153 = sbr.rel (%p150) target = $region12
    $region11: #{basic_conv_forward.3} parent=5 // pred_region
      %s154 = ssub.s32 %s9, 1
      // Predicated region
      $region13: #{basic_conv_forward.3} parent=11 // pred_check
        %p155 = pneg %p84
      $region14: #{basic_conv_forward.3} parent=11 // pred_check_branch
        %157 = sbr.rel (%p155) target = $region16
      $region15: #{basic_conv_forward.3} parent=11 // pred_region
        %s158 = smul.u32 2, %s20
        %p159 = scmp.lt.s32.totalorder %s158, 1
        %s160 = scalar_select %p159, %s158, 1
        %s161 = smul.addr %s160, 8
        %s162 = scalar_lea.vmem %s1, %s161
        %s163 = smul.u32 2, %s20
      $region16: #{basic_conv_forward.3} parent=11 // pred_fallthru
        _
      // Predicated region
      $region17: #{basic_conv_forward.3} parent=11 // pred_check
        %p164 = pneg %p110
      $region18: #{basic_conv_forward.3} parent=11 // pred_check_branch
        %166 = sbr.rel (%p164) target = $region20
      $region19: #{basic_conv_forward.3} parent=11 // pred_region
        %s167 = smul.u32 2, %s20
        %p168 = scmp.lt.s32.totalorder %s167, 1
        %s169 = scalar_select %p168, %s167, 1
        %s170 = smul.addr %s169, 8
        %s171 = scalar_lea.vmem %s2, %s170
        %s172 = smul.u32 2, %s20
      $region20: #{basic_conv_forward.3} parent=11 // pred_fallthru
        _
    $region12: #{basic_conv_forward.3} parent=5 // pred_fallthru
      _
    %p173 = scmp.lt.s32.totalorder %s9, 2
    // Predicated region
    $region21: #{basic_conv_forward.3} parent=5 // pred_check
      %p174 = pneg %p173
    $region22: #{basic_conv_forward.3} parent=5 // pred_check_branch
      %176 = sbr.rel (%p174) target = $region24
    $region23: #{basic_conv_forward.3} parent=5 // pred_region
      // Predicated region
      $region25: #{basic_conv_forward.3} parent=23 // pred_check
        %p177 = pneg %p52
      $region26: #{basic_conv_forward.3} parent=23 // pred_check_branch
        %179 = sbr.rel (%p177) target = $region28
      $region27: #{basic_conv_forward.3} parent=23 // pred_region
        %s180 = smul.u32 2, %s17
        %s181 = smul.u32 2, %s18
        %p182 = scmp.lt.s32.totalorder %s16, 1
        %s183 = scalar_select %p182, %s16, 1
        %p184 = scmp.lt.s32.totalorder %s180, 1
        %s185 = scalar_select %p184, %s180, 1
        %p186 = scmp.lt.s32.totalorder %s181, 1
        %s187 = scalar_select %p186, %s181, 1
        %s188 = smul.addr %s185, 2
        %s189 = sadd.s32 %s187, %s188
        %s190 = smul.addr %s183, 4
        %s191 = sadd.s32 %s189, %s190
        %s192 = smul.addr %s191, 4
        %s193 = scalar_lea.vmem %s0, %s192
        %s194 = smul.u32 2, %s17
        %s195 = smul.u32 2, %s18
      $region28: #{basic_conv_forward.3} parent=23 // pred_fallthru
        _
    $region24: #{basic_conv_forward.3} parent=5 // pred_fallthru
      _
    %p196 = scmp.le.s32.totalorder 1, %s9
    %p197 = scmp.lt.s32.totalorder %s9, 3
    %p198 = pnand %p196, %p197
    %p199 = pneg %p198
    // Predicated region
    $region29: #{basic_conv_forward.3} parent=5 // pred_check
      _
    $region30: #{basic_conv_forward.3} parent=5 // pred_check_branch
      %201 = sbr.rel (%p198) target = $region32
    $region31: #{basic_conv_forward.3} parent=5 // pred_region
      %s202 = ssub.s32 %s9, 1
      %s203 = smul.u32 2, %s20
      %s204 = smul.u32 2, %s21
      %p205 = scmp.lt.s32.totalorder %s19, 1
      %s206 = scalar_select %p205, %s19, 1
      %p207 = scmp.lt.s32.totalorder %s203, 1
      %s208 = scalar_select %p207, %s203, 1
      %p209 = scmp.lt.s32.totalorder %s204, 1
      %s210 = scalar_select %p209, %s204, 1
      %s211 = smul.addr %s208, 2
      %s212 = sadd.s32 %s210, %s211
      %s213 = smul.addr %s206, 4
      %s214 = sadd.s32 %s212, %s213
      %s215 = smul.addr %s214, 4
      %s216 = scalar_lea.vmem %s0, %s215
      %p217 = pneg %p58
      %p218 = pneg %p55
      %s219 = smul.u32 2, %s20
      %p220 = scmp.lt.s32.totalorder %s219, 1
      %s221 = scalar_select %p220, %s219, 1
      %s222 = smul.addr %s221, 8
      %s223 = scalar_lea.vmem %s1, %s222
      %p224 = pneg %p84
      %p225 = pneg %p81
      %s226 = smul.u32 2, %s20
      %p227 = scmp.lt.s32.totalorder %s226, 1
      %s228 = scalar_select %p227, %s226, 1
      %s229 = smul.addr %s228, 8
      %s230 = scalar_lea.vmem %s2, %s229
      %p231 = pneg %p110
      %p232 = pneg %p107
      %p233 = pneg %p140
      %p234 = pneg %p137
      %s235 = smul.u32 2, %s20
      %s236 = smul.u32 2, %s21
      %p237 = scmp.lt.s32.totalorder %s19, 1
      %s238 = scalar_select %p237, %s19, 1
      %p239 = scmp.lt.s32.totalorder %s235, 1
      %s240 = scalar_select %p239, %s235, 1
      %p241 = scmp.lt.s32.totalorder %s236, 1
      %s242 = scalar_select %p241, %s236, 1
      %s243 = smul.addr %s240, 2
      %s244 = sadd.s32 %s242, %s243
      %s245 = smul.addr %s238, 4
      %s246 = sadd.s32 %s244, %s245
      %s247 = smul.addr %s246, 4
      %s248 = scalar_lea.vmem %s3, %s247
      %s249 = smul.u32 2, %s20
      %s250 = smul.u32 2, %s21
      %p251 = scmp.lt.s32.totalorder %s19, 1
      %s252 = scalar_select %p251, %s19, 1
      %p253 = scmp.lt.s32.totalorder %s249, 1
      %s254 = scalar_select %p253, %s249, 1
      %p255 = scmp.lt.s32.totalorder %s250, 1
      %s256 = scalar_select %p255, %s250, 1
      %s257 = smul.addr %s254, 2
      %s258 = sadd.s32 %s256, %s257
      %s259 = smul.addr %s252, 4
      %s260 = sadd.s32 %s258, %s259
      %s261 = smul.addr %s260, 4
      %s262 = scalar_lea.vmem %s0, %s261
      %s263 = smul.u32 2, %s20
      %s264 = smul.u32 2, %s21
      %s265 = smul.u32 2, %s20
      %p266 = scmp.lt.s32.totalorder %s265, 1
      %s267 = scalar_select %p266, %s265, 1
      %s268 = smul.addr %s267, 8
      %s269 = scalar_lea.vmem %s1, %s268
      %s270 = smul.u32 2, %s20
      %s271 = smul.u32 2, %s20
      %p272 = scmp.lt.s32.totalorder %s271, 1
      %s273 = scalar_select %p272, %s271, 1
      %s274 = smul.addr %s273, 8
      %s275 = scalar_lea.vmem %s2, %s274
      %s276 = smul.u32 2, %s20
      %s277 = smul.u32 2, %s20
      %s278 = smul.u32 2, %s21
      %p279 = scmp.lt.s32.totalorder %s19, 1
      %s280 = scalar_select %p279, %s19, 1
      %p281 = scmp.lt.s32.totalorder %s277, 1
      %s282 = scalar_select %p281, %s277, 1
      %p283 = scmp.lt.s32.totalorder %s278, 1
      %s284 = scalar_select %p283, %s278, 1
      %s285 = smul.addr %s282, 2
      %s286 = sadd.s32 %s284, %s285
      %s287 = smul.addr %s280, 4
      %s288 = sadd.s32 %s286, %s287
      %s289 = smul.addr %s288, 4
      %s290 = scalar_lea.vmem %s3, %s289
      %s291 = smul.u32 2, %s20
      %s292 = smul.u32 2, %s21
      %v293 = vld [vmem:[%s262] sm:$0xff]
      %v294 = vld [vmem:[%s262 + $0x8] sm:$0xff]
      %v295 = vunpack.c.l.bf16 %v293
      %v296 = vunpack.c.h.bf16 %v293
      %v297 = vunpack.c.l.bf16 %v294
      %v298 = vunpack.c.h.bf16 %v294
      %v299 = vld [vmem:[%s269] sm:$0xff]
      %v300 = vld [vmem:[%s269 + $0x8] sm:$0xff]
      %302 = vset.pattern.permute.xlu0 0
      %303 = vperm.xlu0 %302, %v299
      %v304 = vpop.permute.xlu0 %303
      %307 = vset.pattern.permute.xlu0 0
      %308 = vperm.xlu0 %307, %v300
      %v309 = vpop.permute.xlu0 %308
      %v311 = vmul.f32 %v295, %v304
      %v312 = vmul.f32 %v296, %v304
      %v313 = vmul.f32 %v297, %v309
      %v314 = vmul.f32 %v298, %v309
      %v315 = vld [vmem:[%s275] sm:$0xff]
      %v316 = vld [vmem:[%s275 + $0x8] sm:$0xff]
      %318 = vset.pattern.permute.xlu0 0
      %319 = vperm.xlu0 %318, %v315
      %v320 = vpop.permute.xlu0 %319
      %323 = vset.pattern.permute.xlu0 0
      %324 = vperm.xlu0 %323, %v316
      %v325 = vpop.permute.xlu0 %324
      %v327 = vadd.f32 %v311, %v320
      %v328 = vadd.f32 %v312, %v320
      %v329 = vadd.f32 %v313, %v325
      %v330 = vadd.f32 %v314, %v325
      %v331 = vmax.f32 %v327, 0.0
      %v332 = vmax.f32 %v328, 0.0
      %v333 = vmax.f32 %v329, 0.0
      %v334 = vmax.f32 %v330, 0.0
      %v335 = vpack.c.bf16 %v333, %v331
      %v336 = vpack.c.bf16 %v334, %v332
      %v339 = vunpack.c.l.b16 %v335
      %v340 = vunpack.c.l.b16 %v336
      %v341 = vunpack.c.h.b16 %v335
      %v342 = vunpack.c.h.b16 %v336
      %v343 = vpack.c.b16 %v340, %v339
      %v344 = vpack.c.b16 %v342, %v341
      %347 = vst [vmem:[%s290] sm:$0xff] %v343
      %348 = vst [vmem:[%s290 + $0x8] sm:$0xff] %v344
      %s349 = smul.u32 2, %s20
      %s350 = smul.u32 2, %s21
      %p351 = scmp.lt.s32.totalorder %s19, 1
      %s352 = scalar_select %p351, %s19, 1
      %p353 = scmp.lt.s32.totalorder %s349, 1
      %s354 = scalar_select %p353, %s349, 1
      %p355 = scmp.lt.s32.totalorder %s350, 1
      %s356 = scalar_select %p355, %s350, 1
      %s357 = smul.addr %s354, 2
      %s358 = sadd.s32 %s356, %s357
      %s359 = smul.addr %s352, 4
      %s360 = sadd.s32 %s358, %s359
      %s361 = smul.addr %s360, 4
      %s362 = scalar_lea.vmem %s3, %s361
      // Predicated region
      $region33: #{basic_conv_forward.3} parent=31 // pred_check
        %p363 = pneg %p137
      $region34: #{basic_conv_forward.3} parent=31 // pred_check_branch
        %365 = sbr.rel (%p363) target = $region36
      $region35: #{basic_conv_forward.3} parent=31 // pred_region
        %s366 = smul.u32 2, %s20
        %s367 = smul.u32 2, %s21
      $region36: #{basic_conv_forward.3} parent=31 // pred_fallthru
        _
    $region32: #{basic_conv_forward.3} parent=5 // pred_fallthru
      _
    %p368 = scmp.le.s32.totalorder 2, %s9
    // Predicated region
    $region37: #{basic_conv_forward.3} parent=5 // pred_check
      %p369 = pneg %p368
    $region38: #{basic_conv_forward.3} parent=5 // pred_check_branch
      %371 = sbr.rel (%p369) target = $region40
    $region39: #{basic_conv_forward.3} parent=5 // pred_region
      %s372 = ssub.s32 %s9, 2
      // Predicated region
      $region41: #{basic_conv_forward.3} parent=39 // pred_check
        %p373 = pneg %p143
      $region42: #{basic_conv_forward.3} parent=39 // pred_check_branch
        %375 = sbr.rel (%p373) target = $region44
      $region43: #{basic_conv_forward.3} parent=39 // pred_region
        %s376 = smul.u32 2, %s23
        %s377 = smul.u32 2, %s24
        %p378 = scmp.lt.s32.totalorder %s22, 1
        %s379 = scalar_select %p378, %s22, 1
        %p380 = scmp.lt.s32.totalorder %s376, 1
        %s381 = scalar_select %p380, %s376, 1
        %p382 = scmp.lt.s32.totalorder %s377, 1
        %s383 = scalar_select %p382, %s377, 1
        %s384 = smul.addr %s381, 2
        %s385 = sadd.s32 %s383, %s384
        %s386 = smul.addr %s379, 4
        %s387 = sadd.s32 %s385, %s386
        %s388 = smul.addr %s387, 4
        %s389 = scalar_lea.vmem %s3, %s388
      $region44: #{basic_conv_forward.3} parent=39 // pred_fallthru
        _
    $region40: #{basic_conv_forward.3} parent=5 // pred_fallthru
      _
  $region6: #{basic_conv_forward.3} parent=0 // loop_footer
    %s13 = sadd.s32 1, %s9
  $region7: #{basic_conv_forward.3} parent=0 // loop_footer_branch
    %8 = sbr.rel target = $region3
  $region8: #{basic_conv_forward.3} parent=0 // loop_exit
    _

// kernel: basic_conv_forward.2
$region0: #{basic_conv_forward.2}
  #allocation0 [shape = 'u32[]', space=smem, size = 0x4, offset = 0x4, fixed_abs, tag = 'smem constant byte address 0x4 - core index']
  #allocation1 [shape = 'u32[144,128]{1,0:T(1,128)}', space=vmem, size = 0x12000, scoped, tag = 'internal scratch']
  #allocation2 [shape = 'f32[16,256]{1,0:T(8,128)}', space=vmem, size = 0x4000, scoped, tag = 'scratch operand']
  %s0 = inlined_call_operand.vmem [shape: bf16[16,36], index: 0, kind: input, shape index: {}]
  %s1 = inlined_call_operand.vmem [shape: bf16[2,36,256], index: 1, kind: input, shape index: {}]
  %s2 = inlined_call_operand.vmem [shape: bf16[2,16,256], index: 2, kind: output, shape index: {0}]
  %s3 = inlined_call_operand.vmem [shape: f32[2,1,16,1], index: 3, kind: output, shape index: {1}]
  %s4 = inlined_call_operand.vmem [shape: f32[2,1,16,1], index: 4, kind: output, shape index: {2}]
  %5 = xla_tuple %s2, %s3, %s4
  %s6 = sld [smem:[#allocation0]]
  $region65: #{basic_conv_forward.2} parent=0
    _
  %s8 = ssub.s32 1, %s6
  %s9 = scalar_select 0, %s8, %s6
  loop: start=0, step=1, limit=4
  $region2: #{basic_conv_forward.2} parent=0 // loop_pre_header
    _
  $region3: #{basic_conv_forward.2} parent=0 // loop_header
    %s11 = sphi 0, %s15
    %p12 = scmp.ge.s32.totalorder %s11, 4
    %s18 = sphi 0, %s44
    %s19 = sphi 0, %s40
    %s20 = sphi 0, %s36
    %s21 = sphi 0, %s32
    %s22 = sphi 0, %s18
    %s23 = sphi 0, %s19
    %s24 = sphi 0, %s20
    %s25 = sphi 0, %s21
    %s26 = sphi 0, %s22
    %s27 = sphi 0, %s23
    %s28 = sphi 0, %s24
    %s29 = sphi 0, %s25
    %s49 = sphi 0, %s51
    %s52 = sphi 0, %s49
    %s53 = sphi 0, %s52
    %s69 = sphi 0, %s53
    %s79 = sphi 0, %s81
    %s82 = sphi 0, %s79
    %s83 = sphi 0, %s82
    %s99 = sphi 0, %s83
    %s109 = sphi 0, %s111
    %s112 = sphi 0, %s109
    %s113 = sphi 0, %s112
    %s129 = sphi 0, %s113
    %s139 = sphi 0, %s141
    %s142 = sphi 0, %s139
    %s143 = sphi 0, %s142
    %s159 = sphi 0, %s143
    %s169 = sphi 0, %s171
    %s172 = sphi 0, %s169
    %s173 = sphi 0, %s172
    %s189 = sphi 0, %s173
  $region4: #{basic_conv_forward.2} parent=0 // loop_header_branch
    %14 = sbr.rel (%p12) target = $region8
  $region5: #{basic_conv_forward.2} parent=0 // loop_body
    %s16 = ssub.s32 %s11, 1
    %s17 = ssub.s32 %s11, 2
    %s30 = sadd.s32 1, %s21
    %p31 = scmp.ge.s32.totalorder %s30, 1
    %s32 = scalar_select %p31, 0, %s30
    %s33 = sadd.s32 1, %s20
    %s34 = scalar_select %p31, %s33, %s20
    %p35 = scmp.ge.s32.totalorder %s34, 1
    %s36 = scalar_select %p35, 0, %s34
    %s37 = sadd.s32 1, %s19
    %s38 = scalar_select %p35, %s37, %s19
    %p39 = scmp.ge.s32.totalorder %s38, 1
    %s40 = scalar_select %p39, 0, %s38
    %s41 = sadd.s32 1, %s18
    %s42 = scalar_select %p39, %s41, %s18
    %p43 = scmp.ge.s32.totalorder %s42, 2
    %s44 = scalar_select %p43, 0, %s42
    %s45 = ssub.s32 %s19, %s40
    %s46 = ssub.s32 %s21, %s32
    %s47 = sor.u32 %s45, %s46
    %p48 = scmp.eq.s32.totalorder %s47, 0
    %s50 = sadd.s32 %s49, 1
    %s51 = scalar_select %p48, %s49, %s50
    %p54 = pneg %p48
    %p55 = scmp.eq.s32.totalorder %s11, 1
    %p56 = por %p54, %p55
    %p57 = scmp.ne.s32.totalorder %s49, %s52
    %p58 = scmp.eq.s32.totalorder %s11, 0
    %p59 = por %p57, %p58
    %p60 = scmp.ne.s32.totalorder %s49, %s52
    %p61 = scmp.eq.s32.totalorder %s16, 1
    %p62 = por %p60, %p61
    %p63 = scmp.ne.s32.totalorder %s52, %s53
    %p64 = scmp.eq.s32.totalorder %s16, 0
    %p65 = por %p63, %p64
    %p66 = scmp.ne.s32.totalorder %s52, %s53
    %p67 = scmp.eq.s32.totalorder %s17, 1
    %p68 = por %p66, %p67
    %p70 = scmp.ne.s32.totalorder %s53, %s69
    %p71 = scmp.eq.s32.totalorder %s17, 0
    %p72 = por %p70, %p71
    %s73 = ssub.s32 %s18, %s44
    %s74 = ssub.s32 %s21, %s32
    %s75 = sor.u32 %s73, %s74
    %s76 = ssub.s32 %s20, %s36
    %s77 = sor.u32 %s75, %s76
    %p78 = scmp.eq.s32.totalorder %s77, 0
    %s80 = sadd.s32 %s79, 1
    %s81 = scalar_select %p78, %s79, %s80
    %p84 = pneg %p78
    %p85 = scmp.eq.s32.totalorder %s11, 1
    %p86 = por %p84, %p85
    %p87 = scmp.ne.s32.totalorder %s79, %s82
    %p88 = scmp.eq.s32.totalorder %s11, 0
    %p89 = por %p87, %p88
    %p90 = scmp.ne.s32.totalorder %s79, %s82
    %p91 = scmp.eq.s32.totalorder %s16, 1
    %p92 = por %p90, %p91
    %p93 = scmp.ne.s32.totalorder %s82, %s83
    %p94 = scmp.eq.s32.totalorder %s16, 0
    %p95 = por %p93, %p94
    %p96 = scmp.ne.s32.totalorder %s82, %s83
    %p97 = scmp.eq.s32.totalorder %s17, 1
    %p98 = por %p96, %p97
    %p100 = scmp.ne.s32.totalorder %s83, %s99
    %p101 = scmp.eq.s32.totalorder %s17, 0
    %p102 = por %p100, %p101
    %s103 = ssub.s32 %s18, %s44
    %s104 = ssub.s32 %s19, %s40
    %s105 = sor.u32 %s103, %s104
    %s106 = ssub.s32 %s20, %s36
    %s107 = sor.u32 %s105, %s106
    %p108 = scmp.eq.s32.totalorder %s107, 0
    %s110 = sadd.s32 %s109, 1
    %s111 = scalar_select %p108, %s109, %s110
    %p114 = pneg %p108
    %p115 = scmp.eq.s32.totalorder %s11, 1
    %p116 = por %p114, %p115
    %p117 = scmp.ne.s32.totalorder %s109, %s112
    %p118 = scmp.eq.s32.totalorder %s11, 0
    %p119 = por %p117, %p118
    %p120 = scmp.ne.s32.totalorder %s109, %s112
    %p121 = scmp.eq.s32.totalorder %s16, 1
    %p122 = por %p120, %p121
    %p123 = scmp.ne.s32.totalorder %s112, %s113
    %p124 = scmp.eq.s32.totalorder %s16, 0
    %p125 = por %p123, %p124
    %p126 = scmp.ne.s32.totalorder %s112, %s113
    %p127 = scmp.eq.s32.totalorder %s17, 1
    %p128 = por %p126, %p127
    %p130 = scmp.ne.s32.totalorder %s113, %s129
    %p131 = scmp.eq.s32.totalorder %s17, 0
    %p132 = por %p130, %p131
    %s133 = ssub.s32 %s18, %s44
    %s134 = ssub.s32 %s20, %s36
    %s135 = sor.u32 %s133, %s134
    %s136 = ssub.s32 %s19, %s40
    %s137 = sor.u32 %s135, %s136
    %p138 = scmp.eq.s32.totalorder %s137, 0
    %s140 = sadd.s32 %s139, 1
    %s141 = scalar_select %p138, %s139, %s140
    %p144 = pneg %p138
    %p145 = scmp.eq.s32.totalorder %s11, 1
    %p146 = por %p144, %p145
    %p147 = scmp.ne.s32.totalorder %s139, %s142
    %p148 = scmp.eq.s32.totalorder %s11, 0
    %p149 = por %p147, %p148
    %p150 = scmp.ne.s32.totalorder %s139, %s142
    %p151 = scmp.eq.s32.totalorder %s16, 1
    %p152 = por %p150, %p151
    %p153 = scmp.ne.s32.totalorder %s142, %s143
    %p154 = scmp.eq.s32.totalorder %s16, 0
    %p155 = por %p153, %p154
    %p156 = scmp.ne.s32.totalorder %s142, %s143
    %p157 = scmp.eq.s32.totalorder %s17, 1
    %p158 = por %p156, %p157
    %p160 = scmp.ne.s32.totalorder %s143, %s159
    %p161 = scmp.eq.s32.totalorder %s17, 0
    %p162 = por %p160, %p161
    %s163 = ssub.s32 %s18, %s44
    %s164 = ssub.s32 %s20, %s36
    %s165 = sor.u32 %s163, %s164
    %s166 = ssub.s32 %s19, %s40
    %s167 = sor.u32 %s165, %s166
    %p168 = scmp.eq.s32.totalorder %s167, 0
    %s170 = sadd.s32 %s169, 1
    %s171 = scalar_select %p168, %s169, %s170
    %p174 = pneg %p168
    %p175 = scmp.eq.s32.totalorder %s11, 1
    %p176 = por %p174, %p175
    %p177 = scmp.ne.s32.totalorder %s169, %s172
    %p178 = scmp.eq.s32.totalorder %s11, 0
    %p179 = por %p177, %p178
    %p180 = scmp.ne.s32.totalorder %s169, %s172
    %p181 = scmp.eq.s32.totalorder %s16, 1
    %p182 = por %p180, %p181
    %p183 = scmp.ne.s32.totalorder %s172, %s173
    %p184 = scmp.eq.s32.totalorder %s16, 0
    %p185 = por %p183, %p184
    %p186 = scmp.ne.s32.totalorder %s172, %s173
    %p187 = scmp.eq.s32.totalorder %s17, 1
    %p188 = por %p186, %p187
    %p190 = scmp.ne.s32.totalorder %s173, %s189
    %p191 = scmp.eq.s32.totalorder %s17, 0
    %p192 = por %p190, %p191
    %p193 = scmp.le.s32.totalorder 1, %s11
    %p194 = scmp.lt.s32.totalorder %s11, 3
    %p195 = pnand %p193, %p194
    %p196 = pneg %p195
    // Predicated region
    $region9: #{basic_conv_forward.2} parent=5 // pred_check
      _
    $region10: #{basic_conv_forward.2} parent=5 // pred_check_branch
      %198 = sbr.rel (%p195) target = $region12
    $region11: #{basic_conv_forward.2} parent=5 // pred_region
      %s199 = ssub.s32 %s11, 1
      // Predicated region
      $region13: #{basic_conv_forward.2} parent=11 // pred_check
        %p200 = pneg %p65
      $region14: #{basic_conv_forward.2} parent=11 // pred_check_branch
        %202 = sbr.rel (%p200) target = $region16
      $region15: #{basic_conv_forward.2} parent=11 // pred_region
        %s203 = smul.u32 2, %s23
        %p204 = scmp.lt.s32.totalorder %s203, 1
        %s205 = scalar_select %p204, %s203, 1
        %p206 = scmp.lt.s32.totalorder %s25, 0
        %s207 = scalar_select %p206, %s25, 0
        %s208 = sadd.s32 %s207, %s205
        %s209 = smul.addr %s208, 4
        %s210 = scalar_lea.vmem %s0, %s209
        %s211 = smul.u32 2, %s23
      $region16: #{basic_conv_forward.2} parent=11 // pred_fallthru
        _
    $region12: #{basic_conv_forward.2} parent=5 // pred_fallthru
      _
    %p212 = scmp.lt.s32.totalorder %s11, 2
    // Predicated region
    $region17: #{basic_conv_forward.2} parent=5 // pred_check
      %p213 = pneg %p212
    $region18: #{basic_conv_forward.2} parent=5 // pred_check_branch
      %215 = sbr.rel (%p213) target = $region20
    $region19: #{basic_conv_forward.2} parent=5 // pred_region
      // Predicated region
      $region21: #{basic_conv_forward.2} parent=19 // pred_check
        %p216 = pneg %p89
      $region22: #{basic_conv_forward.2} parent=19 // pred_check_branch
        %218 = sbr.rel (%p216) target = $region24
      $region23: #{basic_conv_forward.2} parent=19 // pred_region
        %s219 = smul.u32 5, %s21
        %s220 = smul.u32 2, %s20
        %p221 = scmp.lt.s32.totalorder %s18, 1
        %s222 = scalar_select %p221, %s18, 1
        %p223 = scmp.lt.s32.totalorder %s219, 4
        %s224 = scalar_select %p223, %s219, 4
        %p225 = scmp.lt.s32.totalorder %s220, 1
        %s226 = scalar_select %p225, %s220, 1
        %s227 = smul.addr %s224, 2
        %s228 = sadd.s32 %s226, %s227
        %s229 = smul.addr %s222, 10
        %s230 = sadd.s32 %s228, %s229
        %s231 = smul.addr %s230, 4
        %s232 = scalar_lea.vmem %s1, %s231
        %s233 = smul.u32 5, %s21
        %s234 = smul.u32 2, %s20
      $region24: #{basic_conv_forward.2} parent=19 // pred_fallthru
        _
    $region20: #{basic_conv_forward.2} parent=5 // pred_fallthru
      _
    %p235 = scmp.le.s32.totalorder 1, %s11
    %p236 = scmp.lt.s32.totalorder %s11, 3
    %p237 = pnand %p235, %p236
    %p238 = pneg %p237
    // Predicated region
    $region25: #{basic_conv_forward.2} parent=5 // pred_check
      _
    $region26: #{basic_conv_forward.2} parent=5 // pred_check_branch
      %240 = sbr.rel (%p237) target = $region28
    $region27: #{basic_conv_forward.2} parent=5 // pred_region
      %s241 = ssub.s32 %s11, 1
      %s242 = smul.u32 2, %s23
      %p243 = scmp.lt.s32.totalorder %s242, 1
      %s244 = scalar_select %p243, %s242, 1
      %p245 = scmp.lt.s32.totalorder %s25, 0
      %s246 = scalar_select %p245, %s25, 0
      %s247 = sadd.s32 %s246, %s244
      %s248 = smul.addr %s247, 4
      %s249 = scalar_lea.vmem %s0, %s248
      %p250 = pneg %p65
      %p251 = pneg %p62
      %s252 = smul.u32 5, %s25
      %s253 = smul.u32 2, %s24
      %p254 = scmp.lt.s32.totalorder %s22, 1
      %s255 = scalar_select %p254, %s22, 1
      %p256 = scmp.lt.s32.totalorder %s252, 4
      %s257 = scalar_select %p256, %s252, 4
      %p258 = scmp.lt.s32.totalorder %s253, 1
      %s259 = scalar_select %p258, %s253, 1
      %s260 = smul.addr %s257, 2
      %s261 = sadd.s32 %s259, %s260
      %s262 = smul.addr %s255, 10
      %s263 = sadd.s32 %s261, %s262
      %s264 = smul.addr %s263, 4
      %s265 = scalar_lea.vmem %s1, %s264
      %p266 = pneg %p95
      %p267 = pneg %p92
      %p268 = pneg %p125
      %p269 = pneg %p122
      %s270 = smul.u32 2, %s23
      %s271 = smul.u32 2, %s24
      %p272 = scmp.lt.s32.totalorder %s22, 1
      %s273 = scalar_select %p272, %s22, 1
      %p274 = scmp.lt.s32.totalorder %s270, 1
      %s275 = scalar_select %p274, %s270, 1
      %p276 = scmp.lt.s32.totalorder %s271, 1
      %s277 = scalar_select %p276, %s271, 1
      %s278 = smul.addr %s275, 2
      %s279 = sadd.s32 %s277, %s278
      %s280 = smul.addr %s273, 4
      %s281 = sadd.s32 %s279, %s280
      %s282 = smul.addr %s281, 4
      %s283 = scalar_lea.vmem %s2, %s282
      %p284 = pneg %p155
      %p285 = pneg %p152
      %s286 = smul.u32 2, %s23
      %p287 = scmp.lt.s32.totalorder %s22, 1
      %s288 = scalar_select %p287, %s22, 1
      %p289 = scmp.lt.s32.totalorder %s24, 0
      %s290 = scalar_select %p289, %s24, 0
      %p291 = scmp.lt.s32.totalorder %s286, 1
      %s292 = scalar_select %p291, %s286, 1
      %s293 = smul.addr %s290, 2
      %s294 = sadd.s32 %s292, %s293
      %s295 = smul.addr %s288, 2
      %s296 = sadd.s32 %s294, %s295
      %s297 = smul.addr %s296, 8
      %s298 = scalar_lea.vmem %s3, %s297
      %p299 = pneg %p185
      %p300 = pneg %p182
      %s301 = smul.u32 2, %s23
      %p302 = scmp.lt.s32.totalorder %s22, 1
      %s303 = scalar_select %p302, %s22, 1
      %p304 = scmp.lt.s32.totalorder %s24, 0
      %s305 = scalar_select %p304, %s24, 0
      %p306 = scmp.lt.s32.totalorder %s301, 1
      %s307 = scalar_select %p306, %s301, 1
      %s308 = smul.addr %s305, 2
      %s309 = sadd.s32 %s307, %s308
      %s310 = smul.addr %s303, 2
      %s311 = sadd.s32 %s309, %s310
      %s312 = smul.addr %s311, 8
      %s313 = scalar_lea.vmem %s4, %s312
      %s314 = smul.u32 2, %s23
      %p315 = scmp.lt.s32.totalorder %s314, 1
      %s316 = scalar_select %p315, %s314, 1
      %p317 = scmp.lt.s32.totalorder %s25, 0
      %s318 = scalar_select %p317, %s25, 0
      %s319 = sadd.s32 %s318, %s316
      %s320 = smul.addr %s319, 4
      %s321 = scalar_lea.vmem %s0, %s320
      %s322 = smul.u32 2, %s23
      %s323 = smul.u32 5, %s25
      %s324 = smul.u32 2, %s24
      %p325 = scmp.lt.s32.totalorder %s22, 1
      %s326 = scalar_select %p325, %s22, 1
      %p327 = scmp.lt.s32.totalorder %s323, 4
      %s328 = scalar_select %p327, %s323, 4
      %p329 = scmp.lt.s32.totalorder %s324, 1
      %s330 = scalar_select %p329, %s324, 1
      %s331 = smul.addr %s328, 2
      %s332 = sadd.s32 %s330, %s331
      %s333 = smul.addr %s326, 10
      %s334 = sadd.s32 %s332, %s333
      %s335 = smul.addr %s334, 4
      %s336 = scalar_lea.vmem %s1, %s335
      %s337 = smul.u32 5, %s25
      %s338 = smul.u32 2, %s24
      %s339 = smul.u32 2, %s23
      %s340 = smul.u32 2, %s24
      %p341 = scmp.lt.s32.totalorder %s22, 1
      %s342 = scalar_select %p341, %s22, 1
      %p343 = scmp.lt.s32.totalorder %s339, 1
      %s344 = scalar_select %p343, %s339, 1
      %p345 = scmp.lt.s32.totalorder %s340, 1
      %s346 = scalar_select %p345, %s340, 1
      %s347 = smul.addr %s344, 2
      %s348 = sadd.s32 %s346, %s347
      %s349 = smul.addr %s342, 4
      %s350 = sadd.s32 %s348, %s349
      %s351 = smul.addr %s350, 4
      %s352 = scalar_lea.vmem %s2, %s351
      %s353 = smul.u32 2, %s23
      %s354 = smul.u32 2, %s24
      %s355 = smul.u32 2, %s23
      %p356 = scmp.lt.s32.totalorder %s22, 1
      %s357 = scalar_select %p356, %s22, 1
      %p358 = scmp.lt.s32.totalorder %s24, 0
      %s359 = scalar_select %p358, %s24, 0
      %p360 = scmp.lt.s32.totalorder %s355, 1
      %s361 = scalar_select %p360, %s355, 1
      %s362 = smul.addr %s359, 2
      %s363 = sadd.s32 %s361, %s362
      %s364 = smul.addr %s357, 2
      %s365 = sadd.s32 %s363, %s364
      %s366 = smul.addr %s365, 8
      %s367 = scalar_lea.vmem %s3, %s366
      %s368 = smul.u32 2, %s23
      %s369 = smul.u32 2, %s23
      %p370 = scmp.lt.s32.totalorder %s22, 1
      %s371 = scalar_select %p370, %s22, 1
      %p372 = scmp.lt.s32.totalorder %s24, 0
      %s373 = scalar_select %p372, %s24, 0
      %p374 = scmp.lt.s32.totalorder %s369, 1
      %s375 = scalar_select %p374, %s369, 1
      %s376 = smul.addr %s373, 2
      %s377 = sadd.s32 %s375, %s376
      %s378 = smul.addr %s371, 2
      %s379 = sadd.s32 %s377, %s378
      %s380 = smul.addr %s379, 8
      %s381 = scalar_lea.vmem %s4, %s380
      %s382 = smul.u32 2, %s23
      %p384 = scmp.eq.s32.totalorder %s25, 0
      // Predicated region
      $region29: #{basic_conv_forward.2} parent=27 // pred_check
        %p385 = pneg %p384
      $region30: #{basic_conv_forward.2} parent=27 // pred_check_branch
        %387 = sbr.rel (%p385) target = $region32
      $region31: #{basic_conv_forward.2} parent=27 // pred_region
        %388 = vst [vmem:[#allocation2] sm:$0xff] 0.0
        %389 = vst [vmem:[#allocation2 + $0x8] sm:$0xff] 0.0
        %390 = vst [vmem:[#allocation2 + $0x10] sm:$0xff] 0.0
        %391 = vst [vmem:[#allocation2 + $0x18] sm:$0xff] 0.0
      $region32: #{basic_conv_forward.2} parent=27 // pred_fallthru
        _
      %v392 = vld [vmem:[#allocation2] sm:$0xff]
      %v393 = vld [vmem:[#allocation2 + $0x8] sm:$0xff]
      %v394 = vld [vmem:[#allocation2 + $0x10] sm:$0xff]
      %v395 = vld [vmem:[#allocation2 + $0x18] sm:$0xff]
      %v396 = vld [vmem:[%s321] sm:$0xf]
      %v397 = vld [vmem:[%s321 + $0x4] sm:$0xf]
      %v398 = vld [vmem:[%s336] sm:$0xff]
      %v399 = vld [vmem:[%s336 + $0x8] sm:$0xff]
      %v400 = vld [vmem:[%s336 + $0x10] sm:$0xff]
      %v401 = vld [vmem:[%s336 + $0x18] sm:$0xff]
      %v402 = vld [vmem:[%s336 + $0x20] sm:$0x33]
      %v405 = vunpack.c.l.b16 %v396
      %v406 = vunpack.c.l.b16 %v397
      %v407 = vpack.c.b16 %v406, %v405
      %v413 = vunpack.c.l.b16 %v398
      %v414 = vunpack.c.h.b16 %v398
      %v415 = vunpack.c.l.b16 %v399
      %v416 = vunpack.c.h.b16 %v399
      %v417 = vunpack.c.l.b16 %v400
      %v418 = vunpack.c.h.b16 %v400
      %v419 = vunpack.c.l.b16 %v401
      %v420 = vunpack.c.h.b16 %v401
      %v421 = vunpack.c.l.b16 %v402
      %v422 = vunpack.c.h.b16 %v402
      %v423 = vpack.c.b16 %v415, %v413
      %v424 = vpack.c.b16 %v416, %v414
      %v425 = vpack.c.b16 %v419, %v417
      %v426 = vpack.c.b16 %v420, %v418
      %v427 = vpack.c.b16 %v421, %v421
      %v428 = vpack.c.b16 %v422, %v422
      %vm433 = vcmask 293888
      %v435 = vsel %vm433, %v407, 0
      %vm437 = vcmask 1041408
      %v439 = vsel %vm437, %v427, 0
      %v442 = vsel %vm437, %v428, 0
      %444 = vmatprep.subr.bf16.mxu0 %v424
      %445 = vmatpush1.bf16.msra.mxu0 %v423
      %446 = vmatprep.subr.bf16.mxu0 %v426
      %447 = vmatpush1.bf16.msra.mxu0 %v425
      %448 = vmatprep.subr.bf16.mxu0 %v442
      %449 = vmatpush1.bf16.msra.mxu0 %v439
      %450 = vmatprep.subr.bf16.mxu0 0
      %451 = vmatpush1.bf16.msra.mxu0 0
      %452 = vmatprep.subr.bf16.mxu0 0
      %453 = vmatpush1.bf16.msra.mxu0 0
      %454 = vmatprep.subr.bf16.mxu0 0
      %455 = vmatpush1.bf16.msra.mxu0 0
      %456 = vmatprep.subr.bf16.mxu0 0
      %457 = vmatpush1.bf16.msra.mxu0 0
      %458 = vmatprep.subr.bf16.mxu0 0
      %459 = vmatpush1.bf16.msra.mxu0 0
      %460 = vmatprep.subr.bf16.mxu0 0
      %461 = vmatpush1.bf16.msra.mxu0 0
      %462 = vmatprep.subr.bf16.mxu0 0
      %463 = vmatpush1.bf16.msra.mxu0 0
      %464 = vmatprep.subr.bf16.mxu0 0
      %465 = vmatpush1.bf16.msra.mxu0 0
      %466 = vmatprep.subr.bf16.mxu0 0
      %467 = vmatpush1.bf16.msra.mxu0 0
      %468 = vmatprep.subr.bf16.mxu0 0
      %469 = vmatpush1.bf16.msra.mxu0 0
      %470 = vmatprep.subr.bf16.mxu0 0
      %471 = vmatpush1.bf16.msra.mxu0 0
      %472 = vmatprep.subr.bf16.mxu0 0
      %473 = vmatpush1.bf16.msra.mxu0 0
      %474 = vmatprep.subr.bf16.mxu0 0
      %475 = vmatpush1.bf16.msra.mxu0 0
      %476 = vmatprep.mubr.bf16.mxu0 0
      %477 = vmatmul.mubr.bf16.gmra.mrb[0].mxu0 %v435
      %v478 = vpop.f32.mrb[0].mxu0
      %v479 = vadd.f32 0.0, %v478
      %v480 = vpop.f32.mrb[0].mxu0
      %v481 = vadd.f32 0.0, %v480
      %v482 = vpop.f32.mrb[0].mxu0
      %v483 = vadd.f32 0.0, %v482
      %v484 = vpop.f32.mrb[0].mxu0
      %v485 = vadd.f32 0.0, %v484
      %486 = vdwg.mxu0
      %v487 = vadd.f32 %v392, %v479
      %v488 = vadd.f32 %v393, %v481
      %v489 = vadd.f32 %v394, %v483
      %v490 = vadd.f32 %v395, %v485
      %491 = vst [vmem:[#allocation2] sm:$0xff] %v487
      %492 = vst [vmem:[#allocation2 + $0x8] sm:$0xff] %v488
      %493 = vst [vmem:[#allocation2 + $0x10] sm:$0xff] %v489
      %494 = vst [vmem:[#allocation2 + $0x18] sm:$0xff] %v490
      // Predicated region
      $region33: #{basic_conv_forward.2} parent=27 // pred_check
        %p495 = pneg %p384
      $region34: #{basic_conv_forward.2} parent=27 // pred_check_branch
        %497 = sbr.rel (%p495) target = $region36
      $region35: #{basic_conv_forward.2} parent=27 // pred_region
        %v498 = vld [vmem:[#allocation2] sm:$0xff]
        %v499 = vld [vmem:[#allocation2 + $0x8] sm:$0xff]
        %v500 = vld [vmem:[#allocation2 + $0x10] sm:$0xff]
        %v501 = vld [vmem:[#allocation2 + $0x18] sm:$0xff]
        %v502 = vpack.c.bf16 %v500, %v498
        %v503 = vpack.c.bf16 %v501, %v499
        %v506 = vunpack.c.l.b16 %v502
        %v507 = vunpack.c.l.b16 %v503
        %v508 = vunpack.c.h.b16 %v502
        %v509 = vunpack.c.h.b16 %v503
        %v510 = vpack.c.b16 %v507, %v506
        %v511 = vpack.c.b16 %v509, %v508
        %514 = vst [vmem:[%s352] sm:$0xff] %v510
        %515 = vst [vmem:[%s352 + $0x8] sm:$0xff] %v511
        %v516 = vadd.f32 %v498, %v499
        %517 = vadd.xlane.f32.xlu0 %v516
        %v518 = vpop.xlane.xlu0 %517
        %v519 = vadd.f32 %v500, %v501
        %520 = vadd.xlane.f32.xlu0 %v519
        %v521 = vpop.xlane.xlu0 %520
        %vm522 = vcmask 7168
        %523 = vst.msk [vmem:[%s367] sm:$0xff] %vm522, %v518
        %524 = vst.msk [vmem:[%s367 + $0x8] sm:$0xff] %vm522, %v521
        %v525 = vmul.f32 %v498, %v498
        %v526 = vmul.f32 %v499, %v499
        %v527 = vmul.f32 %v500, %v500
        %v528 = vmul.f32 %v501, %v501
        %v529 = vadd.f32 %v525, %v526
        %530 = vadd.xlane.f32.xlu0 %v529
        %v531 = vpop.xlane.xlu0 %530
        %v532 = vadd.f32 %v527, %v528
        %533 = vadd.xlane.f32.xlu0 %v532
        %v534 = vpop.xlane.xlu0 %533
        %535 = vst.msk [vmem:[%s381] sm:$0xff] %vm522, %v531
        %536 = vst.msk [vmem:[%s381 + $0x8] sm:$0xff] %vm522, %v534
      $region36: #{basic_conv_forward.2} parent=27 // pred_fallthru
        _
      %s537 = smul.u32 2, %s23
      %s538 = smul.u32 2, %s24
      %p539 = scmp.lt.s32.totalorder %s22, 1
      %s540 = scalar_select %p539, %s22, 1
      %p541 = scmp.lt.s32.totalorder %s537, 1
      %s542 = scalar_select %p541, %s537, 1
      %p543 = scmp.lt.s32.totalorder %s538, 1
      %s544 = scalar_select %p543, %s538, 1
      %s545 = smul.addr %s542, 2
      %s546 = sadd.s32 %s544, %s545
      %s547 = smul.addr %s540, 4
      %s548 = sadd.s32 %s546, %s547
      %s549 = smul.addr %s548, 4
      %s550 = scalar_lea.vmem %s2, %s549
      %s551 = smul.u32 2, %s23
      %p552 = scmp.lt.s32.totalorder %s22, 1
      %s553 = scalar_select %p552, %s22, 1
      %p554 = scmp.lt.s32.totalorder %s24, 0
      %s555 = scalar_select %p554, %s24, 0
      %p556 = scmp.lt.s32.totalorder %s551, 1
      %s557 = scalar_select %p556, %s551, 1
      %s558 = smul.addr %s555, 2
      %s559 = sadd.s32 %s557, %s558
      %s560 = smul.addr %s553, 2
      %s561 = sadd.s32 %s559, %s560
      %s562 = smul.addr %s561, 8
      %s563 = scalar_lea.vmem %s3, %s562
      %s564 = smul.u32 2, %s23
      %p565 = scmp.lt.s32.totalorder %s22, 1
      %s566 = scalar_select %p565, %s22, 1
      %p567 = scmp.lt.s32.totalorder %s24, 0
      %s568 = scalar_select %p567, %s24, 0
      %p569 = scmp.lt.s32.totalorder %s564, 1
      %s570 = scalar_select %p569, %s564, 1
      %s571 = smul.addr %s568, 2
      %s572 = sadd.s32 %s570, %s571
      %s573 = smul.addr %s566, 2
      %s574 = sadd.s32 %s572, %s573
      %s575 = smul.addr %s574, 8
      %s576 = scalar_lea.vmem %s4, %s575
      // Predicated region
      $region37: #{basic_conv_forward.2} parent=27 // pred_check
        %p577 = pneg %p122
      $region38: #{basic_conv_forward.2} parent=27 // pred_check_branch
        %579 = sbr.rel (%p577) target = $region40
      $region39: #{basic_conv_forward.2} parent=27 // pred_region
        %s580 = smul.u32 2, %s23
        %s581 = smul.u32 2, %s24
      $region40: #{basic_conv_forward.2} parent=27 // pred_fallthru
        _
      // Predicated region
      $region41: #{basic_conv_forward.2} parent=27 // pred_check
        %p582 = pneg %p152
      $region42: #{basic_conv_forward.2} parent=27 // pred_check_branch
        %584 = sbr.rel (%p582) target = $region44
      $region43: #{basic_conv_forward.2} parent=27 // pred_region
        %s585 = smul.u32 2, %s23
      $region44: #{basic_conv_forward.2} parent=27 // pred_fallthru
        _
      // Predicated region
      $region45: #{basic_conv_forward.2} parent=27 // pred_check
        %p586 = pneg %p182
      $region46: #{basic_conv_forward.2} parent=27 // pred_check_branch
        %588 = sbr.rel (%p586) target = $region48
      $region47: #{basic_conv_forward.2} parent=27 // pred_region
        %s589 = smul.u32 2, %s23
      $region48: #{basic_conv_forward.2} parent=27 // pred_fallthru
        _
    $region28: #{basic_conv_forward.2} parent=5 // pred_fallthru
      _
    %p590 = scmp.le.s32.totalorder 2, %s11
    // Predicated region
    $region49: #{basic_conv_forward.2} parent=5 // pred_check
      %p591 = pneg %p590
    $region50: #{basic_conv_forward.2} parent=5 // pred_check_branch
      %593 = sbr.rel (%p591) target = $region52
    $region51: #{basic_conv_forward.2} parent=5 // pred_region
      %s594 = ssub.s32 %s11, 2
      // Predicated region
      $region53: #{basic_conv_forward.2} parent=51 // pred_check
        %p595 = pneg %p128
      $region54: #{basic_conv_forward.2} parent=51 // pred_check_branch
        %597 = sbr.rel (%p595) target = $region56
      $region55: #{basic_conv_forward.2} parent=51 // pred_region
        %s598 = smul.u32 2, %s27
        %s599 = smul.u32 2, %s28
        %p600 = scmp.lt.s32.totalorder %s26, 1
        %s601 = scalar_select %p600, %s26, 1
        %p602 = scmp.lt.s32.totalorder %s598, 1
        %s603 = scalar_select %p602, %s598, 1
        %p604 = scmp.lt.s32.totalorder %s599, 1
        %s605 = scalar_select %p604, %s599, 1
        %s606 = smul.addr %s603, 2
        %s607 = sadd.s32 %s605, %s606
        %s608 = smul.addr %s601, 4
        %s609 = sadd.s32 %s607, %s608
        %s610 = smul.addr %s609, 4
        %s611 = scalar_lea.vmem %s2, %s610
      $region56: #{basic_conv_forward.2} parent=51 // pred_fallthru
        _
      // Predicated region
      $region57: #{basic_conv_forward.2} parent=51 // pred_check
        %p612 = pneg %p158
      $region58: #{basic_conv_forward.2} parent=51 // pred_check_branch
        %614 = sbr.rel (%p612) target = $region60
      $region59: #{basic_conv_forward.2} parent=51 // pred_region
        %s615 = smul.u32 2, %s27
        %p616 = scmp.lt.s32.totalorder %s26, 1
        %s617 = scalar_select %p616, %s26, 1
        %p618 = scmp.lt.s32.totalorder %s28, 0
        %s619 = scalar_select %p618, %s28, 0
        %p620 = scmp.lt.s32.totalorder %s615, 1
        %s621 = scalar_select %p620, %s615, 1
        %s622 = smul.addr %s619, 2
        %s623 = sadd.s32 %s621, %s622
        %s624 = smul.addr %s617, 2
        %s625 = sadd.s32 %s623, %s624
        %s626 = smul.addr %s625, 8
        %s627 = scalar_lea.vmem %s3, %s626
      $region60: #{basic_conv_forward.2} parent=51 // pred_fallthru
        _
      // Predicated region
      $region61: #{basic_conv_forward.2} parent=51 // pred_check
        %p628 = pneg %p188
      $region62: #{basic_conv_forward.2} parent=51 // pred_check_branch
        %630 = sbr.rel (%p628) target = $region64
      $region63: #{basic_conv_forward.2} parent=51 // pred_region
        %s631 = smul.u32 2, %s27
        %p632 = scmp.lt.s32.totalorder %s26, 1
        %s633 = scalar_select %p632, %s26, 1
        %p634 = scmp.lt.s32.totalorder %s28, 0
        %s635 = scalar_select %p634, %s28, 0
        %p636 = scmp.lt.s32.totalorder %s631, 1
        %s637 = scalar_select %p636, %s631, 1
        %s638 = smul.addr %s635, 2
        %s639 = sadd.s32 %s637, %s638
        %s640 = smul.addr %s633, 2
        %s641 = sadd.s32 %s639, %s640
        %s642 = smul.addr %s641, 8
        %s643 = scalar_lea.vmem %s4, %s642
      $region64: #{basic_conv_forward.2} parent=51 // pred_fallthru
        _
    $region52: #{basic_conv_forward.2} parent=5 // pred_fallthru
      _
  $region6: #{basic_conv_forward.2} parent=0 // loop_footer
    %s15 = sadd.s32 1, %s11
  $region7: #{basic_conv_forward.2} parent=0 // loop_footer_branch
    %10 = sbr.rel target = $region3
  $region8: #{basic_conv_forward.2} parent=0 // loop_exit
    _

</llo_original>
